<compile_context>
chip_gen: v7x
topology: tpu7x:2x2x1
jax: 0.10.0
libtpu: 0.0.40
codegen_flags: <defaults>
</compile_context>

<pallas_src>
import functools

import jax
import jax.numpy as jnp
from jax.experimental import pallas as pl
from jax.experimental.pallas import tpu as pltpu

KH, KW = 3, 3  # conv kernel size from the module definition


def conv2d_kernel(x_ref, w_ref, b_ref, o_ref, col_ref, *, img_w):
    # x_ref:   (N, C_in, H*W)       VMEM   NCHW input, spatial flattened
    # w_ref:   (C_out, KH*KW*C_in)  VMEM   taps reordered to (kh, kw, c)
    # b_ref:   (C_out, 1)           VMEM
    # o_ref:   (N, C_out, H*W)      VMEM   conv value at every input-flat pos;
    #                                      wrapper slices the valid window
    # col_ref: (KH*KW*C_in, N*H*W)  VMEM scratch: fused im2col operand
    n, c_in, hw = x_ref.shape

    # Deterministic contents for the tail lanes no tap writes (those lanes
    # only feed output positions the wrapper discards anyway).  One cheap
    # full-width store; avoids reading uninitialized VMEM into the MXU.
    col_ref[...] = jnp.zeros_like(col_ref)

    # Build the im2col buffer once.  Row (kh*KW + kw)*C_in + c, lane b*HW + q
    # holds x[b, c, q + kh*W + kw]; each tap is a static lane shift in the
    # flattened layout (no (8,128)-crossing reshapes, no per-tap relayouts).
    # All slice starts/sizes are static Python ints, so the copies lower to
    # plain (masked only at the tail) VMEM moves.
    for kh in range(KH):
        for kw in range(KW):
            s = kh * img_w + kw                 # static lane shift of this tap
            r = (kh * KW + kw) * c_in           # destination row block
            for b in range(n):                  # N is tiny & static -> unrolled
                col_ref[r:r + c_in, b * hw:b * hw + (hw - s)] = (
                    x_ref[b, :, pl.ds(s, hw - s)]
                )

    # One MXU matmul with K = KH*KW*C_in = 27 for the whole batch, instead of
    # nine K = 3 matmuls per image.  Bias broadcasts over the lane axis.
    acc = jnp.dot(w_ref[...], col_ref[...], preferred_element_type=jnp.float32)
    acc = (acc + b_ref[...]).astype(o_ref.dtype)

    for b in range(n):                          # lane-dense (multiple-of-128) stores
        o_ref[b] = acc[:, b * hw:(b + 1) * hw]


def conv2d_pallas(x_nchw, w_oihw, bias):
    """Valid (no-pad) stride-1 Conv2d matching torch.nn.Conv2d(3, 5, (3, 3))."""
    n, c_in, h, w = x_nchw.shape
    c_out = w_oihw.shape[0]
    h_out, w_out = h - KH + 1, w - KW + 1
    hw = h * w

    # Free reshape only: NCHW is already the layout the kernel computes in.
    x_flat = x_nchw.reshape(n, c_in, hw)
    # Weight reorder touches 135 floats at trace time:
    # OIHW -> (O, KH, KW, I) -> (O, KH*KW*I) to match the im2col row order.
    w_flat = jnp.transpose(w_oihw, (0, 2, 3, 1)).reshape(c_out, KH * KW * c_in)
    b2d = bias.reshape(c_out, 1)

    kernel = functools.partial(conv2d_kernel, img_w=w)

    out_flat = pl.pallas_call(
        kernel,
        out_shape=jax.ShapeDtypeStruct((n, c_out, hw), x_nchw.dtype),
        grid_spec=pltpu.PrefetchScalarGridSpec(
            num_scalar_prefetch=0,
            grid=(1,),                           # whole (tiny) batch in one step
            in_specs=[
                pl.BlockSpec((n, c_in, hw), lambda i: (0, 0, 0)),
                pl.BlockSpec((c_out, KH * KW * c_in), lambda i: (0, 0)),
                pl.BlockSpec((c_out, 1), lambda i: (0, 0)),
            ],
            out_specs=pl.BlockSpec((n, c_out, hw), lambda i: (0, 0, 0)),
            scratch_shapes=[
                pltpu.VMEM((KH * KW * c_in, n * hw), jnp.float32),
            ],
        ),
        compiler_params=pltpu.CompilerParams(
            dimension_semantics=("arbitrary",),
        ),
    )(x_flat, w_flat, b2d)

    # Kernel emits the conv at every input-flat position; the valid result is
    # the top-left (H_out, W_out) window.  This single tiny slice replaces
    # full-array NCHW<->NHWC transposes.
    return out_flat.reshape(n, c_out, h, w)[:, :, :h_out, :w_out]


if __name__ == "__main__":
    key = jax.random.PRNGKey(0)
    k_x, k_w, k_b = jax.random.split(key, 3)

    # Small shapes consistent with the module: batch=2, C_in=3, spatial=16.
    N, C_IN, H, W = 2, 3, 16, 16
    C_OUT = 5

    x = jax.random.normal(k_x, (N, C_IN, H, W), dtype=jnp.float32)

    # Deterministic parameter init (PyTorch-like uniform fan-in bound).
    fan_in = C_IN * KH * KW
    bound = 1.0 / (fan_in ** 0.5)
    w = jax.random.uniform(k_w, (C_OUT, C_IN, KH, KW), dtype=jnp.float32,
                           minval=-bound, maxval=bound)
    b = jax.random.uniform(k_b, (C_OUT,), dtype=jnp.float32,
                           minval=-bound, maxval=bound)

    out = conv2d_pallas(x, w, b)
    jax.block_until_ready(out)

    # Cross-check against plain-JAX reference convolution.
    ref = jax.lax.conv_general_dilated(
        x, w, window_strides=(1, 1), padding="VALID",
        dimension_numbers=("NCHW", "OIHW", "NCHW"),
    ) + b.reshape(1, C_OUT, 1, 1)
    assert out.shape == (N, C_OUT, H - 2, W - 2)
    assert jnp.allclose(out, ref, atol=1e-4, rtol=1e-4)

    print("KERNEL_OK")
</pallas_src>

<mosaic_0001>
module attributes {stable_mosaic.version = 11 : i64} {
  func.func @conv2d_kernel(%arg0: i32, %arg1: memref<2x3x256xf32, #tpu.memory_space<vmem>>, %arg2: memref<5x27xf32, #tpu.memory_space<vmem>>, %arg3: memref<5x1xf32, #tpu.memory_space<vmem>>, %arg4: memref<2x5x256xf32, #tpu.memory_space<vmem>>, %arg5: memref<27x512xf32, #tpu.memory_space<vmem>>) attributes {dimension_semantics = [#tpu.dimension_semantics<arbitrary>], iteration_bounds = array<i64: 1>, scalar_prefetch = 0 : i64, scratch_operands = 1 : i64, tpu.core_type = #tpu.core_type<tc>, window_params = [{pipeline_mode = #tpu.pipeline_mode<synchronous>, transform_indices = @transform_0, window_bounds = array<i64: 2, 3, 256>}, {pipeline_mode = #tpu.pipeline_mode<synchronous>, transform_indices = @transform_1, window_bounds = array<i64: 5, 27>}, {pipeline_mode = #tpu.pipeline_mode<synchronous>, transform_indices = @transform_2, window_bounds = array<i64: 5, 1>}, {pipeline_mode = #tpu.pipeline_mode<synchronous>, transform_indices = @transform_3, window_bounds = array<i64: 2, 5, 256>}]} {
    %cst = arith.constant 0.000000e+00 : f32
    %0 = vector.broadcast %cst : f32 to vector<27x512xf32>
    %c0 = arith.constant 0 : index
    %c0_0 = arith.constant 0 : index
    %1 = vector.load %arg5[%c0, %c0_0] : memref<27x512xf32, #tpu.memory_space<vmem>>, vector<27x512xf32>
    tpu.vector_store %arg5[%c0, %c0_0], %0 {strides = array<i32>} : memref<27x512xf32, #tpu.memory_space<vmem>>, vector<27x512xf32>,
    %c0_1 = arith.constant 0 : index
    %c0_2 = arith.constant 0 : index
    %c0_3 = arith.constant 0 : index
    %2 = vector.load %arg1[%c0_1, %c0_2, %c0_3] : memref<2x3x256xf32, #tpu.memory_space<vmem>>, vector<1x3x256xf32>
    %3 = vector.shape_cast %2 : vector<1x3x256xf32> to vector<3x256xf32>
    %c0_4 = arith.constant 0 : index
    %c0_5 = arith.constant 0 : index
    %4 = vector.load %arg5[%c0_4, %c0_5] : memref<27x512xf32, #tpu.memory_space<vmem>>, vector<3x256xf32>
    tpu.vector_store %arg5[%c0_4, %c0_5], %3 {strides = array<i32>} : memref<27x512xf32, #tpu.memory_space<vmem>>, vector<3x256xf32>,
    %c1 = arith.constant 1 : index
    %c0_6 = arith.constant 0 : index
    %c0_7 = arith.constant 0 : index
    %5 = vector.load %arg1[%c1, %c0_6, %c0_7] : memref<2x3x256xf32, #tpu.memory_space<vmem>>, vector<1x3x256xf32>
    %6 = vector.shape_cast %5 : vector<1x3x256xf32> to vector<3x256xf32>
    %c0_8 = arith.constant 0 : index
    %c256 = arith.constant 256 : index
    %7 = vector.load %arg5[%c0_8, %c256] : memref<27x512xf32, #tpu.memory_space<vmem>>, vector<3x256xf32>
    tpu.vector_store %arg5[%c0_8, %c256], %6 {strides = array<i32>} : memref<27x512xf32, #tpu.memory_space<vmem>>, vector<3x256xf32>,
    %c0_9 = arith.constant 0 : index
    %c0_10 = arith.constant 0 : index
    %c1_11 = arith.constant 1 : index
    %8 = vector.load %arg1[%c0_9, %c0_10, %c1_11] : memref<2x3x256xf32, #tpu.memory_space<vmem>>, vector<1x3x255xf32>
    %9 = vector.shape_cast %8 : vector<1x3x255xf32> to vector<3x255xf32>
    %c3 = arith.constant 3 : index
    %c0_12 = arith.constant 0 : index
    %10 = vector.load %arg5[%c3, %c0_12] : memref<27x512xf32, #tpu.memory_space<vmem>>, vector<3x255xf32>
    tpu.vector_store %arg5[%c3, %c0_12], %9 {strides = array<i32>} : memref<27x512xf32, #tpu.memory_space<vmem>>, vector<3x255xf32>,
    %c1_13 = arith.constant 1 : index
    %c0_14 = arith.constant 0 : index
    %c1_15 = arith.constant 1 : index
    %11 = vector.load %arg1[%c1_13, %c0_14, %c1_15] : memref<2x3x256xf32, #tpu.memory_space<vmem>>, vector<1x3x255xf32>
    %12 = vector.shape_cast %11 : vector<1x3x255xf32> to vector<3x255xf32>
    %c3_16 = arith.constant 3 : index
    %c256_17 = arith.constant 256 : index
    %13 = vector.load %arg5[%c3_16, %c256_17] : memref<27x512xf32, #tpu.memory_space<vmem>>, vector<3x255xf32>
    tpu.vector_store %arg5[%c3_16, %c256_17], %12 {strides = array<i32>} : memref<27x512xf32, #tpu.memory_space<vmem>>, vector<3x255xf32>,
    %c0_18 = arith.constant 0 : index
    %c0_19 = arith.constant 0 : index
    %c2 = arith.constant 2 : index
    %14 = vector.load %arg1[%c0_18, %c0_19, %c2] : memref<2x3x256xf32, #tpu.memory_space<vmem>>, vector<1x3x254xf32>
    %15 = vector.shape_cast %14 : vector<1x3x254xf32> to vector<3x254xf32>
    %c6 = arith.constant 6 : index
    %c0_20 = arith.constant 0 : index
    %16 = vector.load %arg5[%c6, %c0_20] : memref<27x512xf32, #tpu.memory_space<vmem>>, vector<3x254xf32>
    tpu.vector_store %arg5[%c6, %c0_20], %15 {strides = array<i32>} : memref<27x512xf32, #tpu.memory_space<vmem>>, vector<3x254xf32>,
    %c1_21 = arith.constant 1 : index
    %c0_22 = arith.constant 0 : index
    %c2_23 = arith.constant 2 : index
    %17 = vector.load %arg1[%c1_21, %c0_22, %c2_23] : memref<2x3x256xf32, #tpu.memory_space<vmem>>, vector<1x3x254xf32>
    %18 = vector.shape_cast %17 : vector<1x3x254xf32> to vector<3x254xf32>
    %c6_24 = arith.constant 6 : index
    %c256_25 = arith.constant 256 : index
    %19 = vector.load %arg5[%c6_24, %c256_25] : memref<27x512xf32, #tpu.memory_space<vmem>>, vector<3x254xf32>
    tpu.vector_store %arg5[%c6_24, %c256_25], %18 {strides = array<i32>} : memref<27x512xf32, #tpu.memory_space<vmem>>, vector<3x254xf32>,
    %c0_26 = arith.constant 0 : index
    %c0_27 = arith.constant 0 : index
    %c16 = arith.constant 16 : index
    %20 = vector.load %arg1[%c0_26, %c0_27, %c16] : memref<2x3x256xf32, #tpu.memory_space<vmem>>, vector<1x3x240xf32>
    %21 = vector.shape_cast %20 : vector<1x3x240xf32> to vector<3x240xf32>
    %c9 = arith.constant 9 : index
    %c0_28 = arith.constant 0 : index
    %22 = vector.load %arg5[%c9, %c0_28] : memref<27x512xf32, #tpu.memory_space<vmem>>, vector<3x240xf32>
    tpu.vector_store %arg5[%c9, %c0_28], %21 {strides = array<i32>} : memref<27x512xf32, #tpu.memory_space<vmem>>, vector<3x240xf32>,
    %c1_29 = arith.constant 1 : index
    %c0_30 = arith.constant 0 : index
    %c16_31 = arith.constant 16 : index
    %23 = vector.load %arg1[%c1_29, %c0_30, %c16_31] : memref<2x3x256xf32, #tpu.memory_space<vmem>>, vector<1x3x240xf32>
    %24 = vector.shape_cast %23 : vector<1x3x240xf32> to vector<3x240xf32>
    %c9_32 = arith.constant 9 : index
    %c256_33 = arith.constant 256 : index
    %25 = vector.load %arg5[%c9_32, %c256_33] : memref<27x512xf32, #tpu.memory_space<vmem>>, vector<3x240xf32>
    tpu.vector_store %arg5[%c9_32, %c256_33], %24 {strides = array<i32>} : memref<27x512xf32, #tpu.memory_space<vmem>>, vector<3x240xf32>,
    %c0_34 = arith.constant 0 : index
    %c0_35 = arith.constant 0 : index
    %c17 = arith.constant 17 : index
    %26 = vector.load %arg1[%c0_34, %c0_35, %c17] : memref<2x3x256xf32, #tpu.memory_space<vmem>>, vector<1x3x239xf32>
    %27 = vector.shape_cast %26 : vector<1x3x239xf32> to vector<3x239xf32>
    %c12 = arith.constant 12 : index
    %c0_36 = arith.constant 0 : index
    %28 = vector.load %arg5[%c12, %c0_36] : memref<27x512xf32, #tpu.memory_space<vmem>>, vector<3x239xf32>
    tpu.vector_store %arg5[%c12, %c0_36], %27 {strides = array<i32>} : memref<27x512xf32, #tpu.memory_space<vmem>>, vector<3x239xf32>,
    %c1_37 = arith.constant 1 : index
    %c0_38 = arith.constant 0 : index
    %c17_39 = arith.constant 17 : index
    %29 = vector.load %arg1[%c1_37, %c0_38, %c17_39] : memref<2x3x256xf32, #tpu.memory_space<vmem>>, vector<1x3x239xf32>
    %30 = vector.shape_cast %29 : vector<1x3x239xf32> to vector<3x239xf32>
    %c12_40 = arith.constant 12 : index
    %c256_41 = arith.constant 256 : index
    %31 = vector.load %arg5[%c12_40, %c256_41] : memref<27x512xf32, #tpu.memory_space<vmem>>, vector<3x239xf32>
    tpu.vector_store %arg5[%c12_40, %c256_41], %30 {strides = array<i32>} : memref<27x512xf32, #tpu.memory_space<vmem>>, vector<3x239xf32>,
    %c0_42 = arith.constant 0 : index
    %c0_43 = arith.constant 0 : index
    %c18 = arith.constant 18 : index
    %32 = vector.load %arg1[%c0_42, %c0_43, %c18] : memref<2x3x256xf32, #tpu.memory_space<vmem>>, vector<1x3x238xf32>
    %33 = vector.shape_cast %32 : vector<1x3x238xf32> to vector<3x238xf32>
    %c15 = arith.constant 15 : index
    %c0_44 = arith.constant 0 : index
    %34 = vector.load %arg5[%c15, %c0_44] : memref<27x512xf32, #tpu.memory_space<vmem>>, vector<3x238xf32>
    tpu.vector_store %arg5[%c15, %c0_44], %33 {strides = array<i32>} : memref<27x512xf32, #tpu.memory_space<vmem>>, vector<3x238xf32>,
    %c1_45 = arith.constant 1 : index
    %c0_46 = arith.constant 0 : index
    %c18_47 = arith.constant 18 : index
    %35 = vector.load %arg1[%c1_45, %c0_46, %c18_47] : memref<2x3x256xf32, #tpu.memory_space<vmem>>, vector<1x3x238xf32>
    %36 = vector.shape_cast %35 : vector<1x3x238xf32> to vector<3x238xf32>
    %c15_48 = arith.constant 15 : index
    %c256_49 = arith.constant 256 : index
    %37 = vector.load %arg5[%c15_48, %c256_49] : memref<27x512xf32, #tpu.memory_space<vmem>>, vector<3x238xf32>
    tpu.vector_store %arg5[%c15_48, %c256_49], %36 {strides = array<i32>} : memref<27x512xf32, #tpu.memory_space<vmem>>, vector<3x238xf32>,
    %c0_50 = arith.constant 0 : index
    %c0_51 = arith.constant 0 : index
    %c32 = arith.constant 32 : index
    %38 = vector.load %arg1[%c0_50, %c0_51, %c32] : memref<2x3x256xf32, #tpu.memory_space<vmem>>, vector<1x3x224xf32>
    %39 = vector.shape_cast %38 : vector<1x3x224xf32> to vector<3x224xf32>
    %c18_52 = arith.constant 18 : index
    %c0_53 = arith.constant 0 : index
    %40 = vector.load %arg5[%c18_52, %c0_53] : memref<27x512xf32, #tpu.memory_space<vmem>>, vector<3x224xf32>
    tpu.vector_store %arg5[%c18_52, %c0_53], %39 {strides = array<i32>} : memref<27x512xf32, #tpu.memory_space<vmem>>, vector<3x224xf32>,
    %c1_54 = arith.constant 1 : index
    %c0_55 = arith.constant 0 : index
    %c32_56 = arith.constant 32 : index
    %41 = vector.load %arg1[%c1_54, %c0_55, %c32_56] : memref<2x3x256xf32, #tpu.memory_space<vmem>>, vector<1x3x224xf32>
    %42 = vector.shape_cast %41 : vector<1x3x224xf32> to vector<3x224xf32>
    %c18_57 = arith.constant 18 : index
    %c256_58 = arith.constant 256 : index
    %43 = vector.load %arg5[%c18_57, %c256_58] : memref<27x512xf32, #tpu.memory_space<vmem>>, vector<3x224xf32>
    tpu.vector_store %arg5[%c18_57, %c256_58], %42 {strides = array<i32>} : memref<27x512xf32, #tpu.memory_space<vmem>>, vector<3x224xf32>,
    %c0_59 = arith.constant 0 : index
    %c0_60 = arith.constant 0 : index
    %c33 = arith.constant 33 : index
    %44 = vector.load %arg1[%c0_59, %c0_60, %c33] : memref<2x3x256xf32, #tpu.memory_space<vmem>>, vector<1x3x223xf32>
    %45 = vector.shape_cast %44 : vector<1x3x223xf32> to vector<3x223xf32>
    %c21 = arith.constant 21 : index
    %c0_61 = arith.constant 0 : index
    %46 = vector.load %arg5[%c21, %c0_61] : memref<27x512xf32, #tpu.memory_space<vmem>>, vector<3x223xf32>
    tpu.vector_store %arg5[%c21, %c0_61], %45 {strides = array<i32>} : memref<27x512xf32, #tpu.memory_space<vmem>>, vector<3x223xf32>,
    %c1_62 = arith.constant 1 : index
    %c0_63 = arith.constant 0 : index
    %c33_64 = arith.constant 33 : index
    %47 = vector.load %arg1[%c1_62, %c0_63, %c33_64] : memref<2x3x256xf32, #tpu.memory_space<vmem>>, vector<1x3x223xf32>
    %48 = vector.shape_cast %47 : vector<1x3x223xf32> to vector<3x223xf32>
    %c21_65 = arith.constant 21 : index
    %c256_66 = arith.constant 256 : index
    %49 = vector.load %arg5[%c21_65, %c256_66] : memref<27x512xf32, #tpu.memory_space<vmem>>, vector<3x223xf32>
    tpu.vector_store %arg5[%c21_65, %c256_66], %48 {strides = array<i32>} : memref<27x512xf32, #tpu.memory_space<vmem>>, vector<3x223xf32>,
    %c0_67 = arith.constant 0 : index
    %c0_68 = arith.constant 0 : index
    %c34 = arith.constant 34 : index
    %50 = vector.load %arg1[%c0_67, %c0_68, %c34] : memref<2x3x256xf32, #tpu.memory_space<vmem>>, vector<1x3x222xf32>
    %51 = vector.shape_cast %50 : vector<1x3x222xf32> to vector<3x222xf32>
    %c24 = arith.constant 24 : index
    %c0_69 = arith.constant 0 : index
    %52 = vector.load %arg5[%c24, %c0_69] : memref<27x512xf32, #tpu.memory_space<vmem>>, vector<3x222xf32>
    tpu.vector_store %arg5[%c24, %c0_69], %51 {strides = array<i32>} : memref<27x512xf32, #tpu.memory_space<vmem>>, vector<3x222xf32>,
    %c1_70 = arith.constant 1 : index
    %c0_71 = arith.constant 0 : index
    %c34_72 = arith.constant 34 : index
    %53 = vector.load %arg1[%c1_70, %c0_71, %c34_72] : memref<2x3x256xf32, #tpu.memory_space<vmem>>, vector<1x3x222xf32>
    %54 = vector.shape_cast %53 : vector<1x3x222xf32> to vector<3x222xf32>
    %c24_73 = arith.constant 24 : index
    %c256_74 = arith.constant 256 : index
    %55 = vector.load %arg5[%c24_73, %c256_74] : memref<27x512xf32, #tpu.memory_space<vmem>>, vector<3x222xf32>
    tpu.vector_store %arg5[%c24_73, %c256_74], %54 {strides = array<i32>} : memref<27x512xf32, #tpu.memory_space<vmem>>, vector<3x222xf32>,
    %c0_75 = arith.constant 0 : index
    %c0_76 = arith.constant 0 : index
    %56 = vector.load %arg2[%c0_75, %c0_76] : memref<5x27xf32, #tpu.memory_space<vmem>>, vector<5x27xf32>
    %c0_77 = arith.constant 0 : index
    %c0_78 = arith.constant 0 : index
    %57 = vector.load %arg5[%c0_77, %c0_78] : memref<27x512xf32, #tpu.memory_space<vmem>>, vector<27x512xf32>
    %cst_79 = arith.constant dense<0.000000e+00> : vector<5x512xf32>
    %58 = tpu.matmul %56, %57, %cst_79 {dimension_numbers = #tpu.dot_dimension_numbers<[1], [0], [0], [1], [0, 0, 1, 1], [], []>} : vector<5x27xf32>, vector<27x512xf32>, vector<5x512xf32> -> vector<5x512xf32>
    %c0_80 = arith.constant 0 : index
    %c0_81 = arith.constant 0 : index
    %59 = vector.load %arg3[%c0_80, %c0_81] : memref<5x1xf32, #tpu.memory_space<vmem>>, vector<5x1xf32>
    %60 = vector.broadcast %59 : vector<5x1xf32> to vector<5x512xf32>
    %61 = arith.addf %58, %60 : vector<5x512xf32>
    %62 = vector.extract_strided_slice %61 {offsets = [0, 0], sizes = [5, 256], strides = [1, 1]} : vector<5x512xf32> to vector<5x256xf32>
    %c0_82 = arith.constant 0 : index
    %c0_83 = arith.constant 0 : index
    %c0_84 = arith.constant 0 : index
    %63 = vector.load %arg4[%c0_82, %c0_83, %c0_84] : memref<2x5x256xf32, #tpu.memory_space<vmem>>, vector<1x5x256xf32>
    %64 = vector.shape_cast %63 : vector<1x5x256xf32> to vector<5x256xf32>
    %65 = vector.shape_cast %62 : vector<5x256xf32> to vector<1x5x256xf32>
    tpu.vector_store %arg4[%c0_82, %c0_83, %c0_84], %65 {strides = array<i32>} : memref<2x5x256xf32, #tpu.memory_space<vmem>>, vector<1x5x256xf32>,
    %66 = vector.extract_strided_slice %61 {offsets = [0, 256], sizes = [5, 256], strides = [1, 1]} : vector<5x512xf32> to vector<5x256xf32>
    %c1_85 = arith.constant 1 : index
    %c0_86 = arith.constant 0 : index
    %c0_87 = arith.constant 0 : index
    %67 = vector.load %arg4[%c1_85, %c0_86, %c0_87] : memref<2x5x256xf32, #tpu.memory_space<vmem>>, vector<1x5x256xf32>
    %68 = vector.shape_cast %67 : vector<1x5x256xf32> to vector<5x256xf32>
    %69 = vector.shape_cast %66 : vector<5x256xf32> to vector<1x5x256xf32>
    tpu.vector_store %arg4[%c1_85, %c0_86, %c0_87], %69 {strides = array<i32>} : memref<2x5x256xf32, #tpu.memory_space<vmem>>, vector<1x5x256xf32>,
    return
  }
  func.func @transform_0(%arg0: i32) -> (i32, i32, i32) {
    %c0_i32 = arith.constant 0 : i32
    %c0_i32_0 = arith.constant 0 : i32
    %c0_i32_1 = arith.constant 0 : i32
    %c0_i32_2 = arith.constant 0 : i32
    return %c0_i32, %c0_i32_0, %c0_i32_1 : i32, i32, i32
  }
  func.func @transform_1(%arg0: i32) -> (i32, i32) {
    %c0_i32 = arith.constant 0 : i32
    %c0_i32_0 = arith.constant 0 : i32
    %c0_i32_1 = arith.constant 0 : i32
    return %c0_i32, %c0_i32_0 : i32, i32
  }
  func.func @transform_2(%arg0: i32) -> (i32, i32) {
    %c0_i32 = arith.constant 0 : i32
    %c0_i32_0 = arith.constant 0 : i32
    %c0_i32_1 = arith.constant 0 : i32
    return %c0_i32, %c0_i32_0 : i32, i32
  }
  func.func @transform_3(%arg0: i32) -> (i32, i32, i32) {
    %c0_i32 = arith.constant 0 : i32
    %c0_i32_0 = arith.constant 0 : i32
    %c0_i32_1 = arith.constant 0 : i32
    %c0_i32_2 = arith.constant 0 : i32
    return %c0_i32, %c0_i32_0, %c0_i32_1 : i32, i32, i32
  }
}

</mosaic_0001>

<llo_original>
// kernel: tpu_custom_call.1
$region0: #{tpu_custom_call.1}
  #allocation0 [shape = 'u32[]', space=smem, size = 0x4, offset = 0x4, fixed_abs, tag = 'smem constant byte address 0x4 - core index']
  #allocation1 [shape = 'u32[144,128]{1,0:T(1,128)}', space=vmem, size = 0x12000, scoped, tag = 'internal scratch']
  #allocation2 [shape = 'f32[27,512]{1,0:T(8,128)}', space=vmem, size = 0x10000, scoped, tag = 'scratch operand']
  %s0 = inlined_call_operand.vmem [shape: f32[2,3,256], index: 0, kind: input, shape index: {}]
  %s1 = inlined_call_operand.vmem [shape: f32[5,27], index: 1, kind: input, shape index: {}]
  %s2 = inlined_call_operand.vmem [shape: f32[5,1], index: 2, kind: input, shape index: {}]
  %s3 = inlined_call_operand.vmem [shape: f32[2,5,256], index: 3, kind: output, shape index: {}]
  %s4 = sld [smem:[#allocation0]]
  $region22: #{tpu_custom_call.1} parent=0
    _
  %s6 = ssub.s32 1, %s4
  %s7 = scalar_select 0, %s6, %s4
  // Predicated region
  $region2: #{tpu_custom_call.1} parent=0 // pred_check
    _
  $region3: #{tpu_custom_call.1} parent=0 // pred_check_branch
    %9 = sbr.rel (0) target = $region5
  $region4: #{tpu_custom_call.1} parent=0 // pred_region
    _
  $region5: #{tpu_custom_call.1} parent=0 // pred_fallthru
    _
  // Predicated region
  $region6: #{tpu_custom_call.1} parent=0 // pred_check
    _
  $region7: #{tpu_custom_call.1} parent=0 // pred_check_branch
    %11 = sbr.rel (0) target = $region9
  $region8: #{tpu_custom_call.1} parent=0 // pred_region
    _
  $region9: #{tpu_custom_call.1} parent=0 // pred_fallthru
    _
  // Predicated region
  $region10: #{tpu_custom_call.1} parent=0 // pred_check
    _
  $region11: #{tpu_custom_call.1} parent=0 // pred_check_branch
    %13 = sbr.rel (0) target = $region13
  $region12: #{tpu_custom_call.1} parent=0 // pred_region
    _
  $region13: #{tpu_custom_call.1} parent=0 // pred_fallthru
    _
  %14 = vst [vmem:[#allocation2] sm:$0xff] 0.0
  %15 = vst [vmem:[#allocation2 + $0x8] sm:$0xff] 0.0
  %16 = vst [vmem:[#allocation2 + $0x10] sm:$0xff] 0.0
  %17 = vst [vmem:[#allocation2 + $0x18] sm:$0xff] 0.0
  %18 = vst [vmem:[#allocation2 + $0x20] sm:$0xff] 0.0
  %19 = vst [vmem:[#allocation2 + $0x28] sm:$0xff] 0.0
  %20 = vst [vmem:[#allocation2 + $0x30] sm:$0xff] 0.0
  %21 = vst [vmem:[#allocation2 + $0x38] sm:$0xff] 0.0
  %22 = vst [vmem:[#allocation2 + $0x40] sm:$0xff] 0.0
  %23 = vst [vmem:[#allocation2 + $0x48] sm:$0xff] 0.0
  %24 = vst [vmem:[#allocation2 + $0x50] sm:$0xff] 0.0
  %25 = vst [vmem:[#allocation2 + $0x58] sm:$0xff] 0.0
  %26 = vst [vmem:[#allocation2 + $0x60] sm:$0x7] 0.0
  %27 = vst [vmem:[#allocation2 + $0x68] sm:$0x7] 0.0
  %28 = vst [vmem:[#allocation2 + $0x70] sm:$0x7] 0.0
  %29 = vst [vmem:[#allocation2 + $0x78] sm:$0x7] 0.0
  %v30 = vld [vmem:[%s0] sm:$0x77]
  %v32 = vcombine.high %v30, %v30
  %34 = vst [vmem:[#allocation2] sm:$0x7] %v30
  %35 = vst [vmem:[#allocation2 + $0x8] sm:$0x7] %v32
  %s36 = scalar_lea.vmem %s0, 8
  %v37 = vld [vmem:[%s36] sm:$0x77]
  %v39 = vcombine.high %v37, %v37
  %41 = vst [vmem:[#allocation2 + $0x10] sm:$0x7] %v37
  %42 = vst [vmem:[#allocation2 + $0x18] sm:$0x7] %v39
  %v43 = vld [vmem:[%s0] sm:$0x77]
  %v45 = vcombine.high %v43, %v43
  %v46 = vrot.slane %v43, 5
  %v47 = vrot.slane %v45, 5
  %48 = vrot.lane.b32.xlu0 %v46, 127
  %v49 = vpop.permute.xlu0 %48
  %50 = vrot.lane.b32.xlu0 %v47, 127
  %v51 = vpop.permute.xlu0 %50
  %vm52 = vcmask 1039360
  %v53 = vsel %vm52, %v49, %v51
  %56 = vst [vmem:[#allocation2] sm:$0x38] %v53
  %vm57 = vcmask 1037315
  %58 = vst.msk [vmem:[#allocation2 + $0x8] sm:$0x38] %vm57, %v51
  %v59 = vld [vmem:[%s36] sm:$0x77]
  %v61 = vcombine.high %v59, %v59
  %v62 = vrot.slane %v59, 5
  %v63 = vrot.slane %v61, 5
  %64 = vrot.lane.b32.xlu0 %v62, 127
  %v65 = vpop.permute.xlu0 %64
  %66 = vrot.lane.b32.xlu0 %v63, 127
  %v67 = vpop.permute.xlu0 %66
  %v68 = vsel %vm52, %v65, %v67
  %71 = vst [vmem:[#allocation2 + $0x10] sm:$0x38] %v68
  %72 = vst.msk [vmem:[#allocation2 + $0x18] sm:$0x38] %vm57, %v67
  %v73 = vld [vmem:[%s0] sm:$0x77]
  %v75 = vcombine.high %v73, %v73
  %v76 = vrot.slane %v73, 2
  %v77 = vrot.slane %v75, 2
  %78 = vrot.lane.b32.xlu0 %v76, 126
  %v79 = vpop.permute.xlu0 %78
  %80 = vrot.lane.b32.xlu0 %v77, 126
  %v81 = vpop.permute.xlu0 %80
  %vm82 = vcmask 1031168
  %v83 = vsel %vm82, %v79, %v81
  %86 = vst [vmem:[#allocation2] sm:$0xc0] %v83
  %vm87 = vcmask 1031174
  %88 = vst.msk [vmem:[#allocation2 + $0x8] sm:$0xc0] %vm87, %v81
  %89 = vst [vmem:[#allocation2 + $0x20] sm:$0x1] %v83
  %vm90 = vcmask 1024000
  %91 = vst.msk [vmem:[#allocation2 + $0x28] sm:$0x1] %vm90, %v81
  %v92 = vld [vmem:[%s36] sm:$0x77]
  %v94 = vcombine.high %v92, %v92
  %v95 = vrot.slane %v92, 2
  %v96 = vrot.slane %v94, 2
  %97 = vrot.lane.b32.xlu0 %v95, 126
  %v98 = vpop.permute.xlu0 %97
  %99 = vrot.lane.b32.xlu0 %v96, 126
  %v100 = vpop.permute.xlu0 %99
  %v101 = vsel %vm82, %v98, %v100
  %104 = vst [vmem:[#allocation2 + $0x10] sm:$0xc0] %v101
  %105 = vst.msk [vmem:[#allocation2 + $0x18] sm:$0xc0] %vm87, %v100
  %106 = vst [vmem:[#allocation2 + $0x30] sm:$0x1] %v101
  %107 = vst.msk [vmem:[#allocation2 + $0x38] sm:$0x1] %vm90, %v100
  %v108 = vld [vmem:[%s0] sm:$0x77]
  %v110 = vcombine.high %v108, %v108
  %v111 = vrot.slane %v108, 7
  %v112 = vrot.slane %v110, 7
  %113 = vrot.lane.b32.xlu0 %v111, 112
  %v114 = vpop.permute.xlu0 %113
  %115 = vrot.lane.b32.xlu0 %v112, 112
  %v116 = vpop.permute.xlu0 %115
  %vm117 = vcmask 916480
  %v118 = vsel %vm117, %v114, %v116
  %121 = vst [vmem:[#allocation2 + $0x20] sm:$0xe] %v118
  %vm122 = vcmask 912385
  %123 = vst.msk [vmem:[#allocation2 + $0x28] sm:$0xe] %vm122, %v116
  %v124 = vld [vmem:[%s36] sm:$0x77]
  %v126 = vcombine.high %v124, %v124
  %v127 = vrot.slane %v124, 7
  %v128 = vrot.slane %v126, 7
  %129 = vrot.lane.b32.xlu0 %v127, 112
  %v130 = vpop.permute.xlu0 %129
  %131 = vrot.lane.b32.xlu0 %v128, 112
  %v132 = vpop.permute.xlu0 %131
  %v133 = vsel %vm117, %v130, %v132
  %136 = vst [vmem:[#allocation2 + $0x30] sm:$0xe] %v133
  %137 = vst.msk [vmem:[#allocation2 + $0x38] sm:$0xe] %vm122, %v132
  %v138 = vld [vmem:[%s0] sm:$0x77]
  %v140 = vcombine.low %v138, %v138
  %141 = vrot.lane.b32.xlu0 %v140, 111
  %v142 = vpop.permute.xlu0 %141
  %143 = vrot.lane.b32.xlu0 %v138, 111
  %v144 = vpop.permute.xlu0 %143
  %vm145 = vcmask 908288
  %v146 = vsel %vm145, %v142, %v144
  %149 = vst [vmem:[#allocation2 + $0x20] sm:$0x70] %v146
  %vm150 = vcmask 907268
  %151 = vst.msk [vmem:[#allocation2 + $0x28] sm:$0x70] %vm150, %v144
  %v152 = vld [vmem:[%s36] sm:$0x77]
  %v154 = vcombine.low %v152, %v152
  %155 = vrot.lane.b32.xlu0 %v154, 111
  %v156 = vpop.permute.xlu0 %155
  %157 = vrot.lane.b32.xlu0 %v152, 111
  %v158 = vpop.permute.xlu0 %157
  %v159 = vsel %vm145, %v156, %v158
  %162 = vst [vmem:[#allocation2 + $0x30] sm:$0x70] %v159
  %163 = vst.msk [vmem:[#allocation2 + $0x38] sm:$0x70] %vm150, %v158
  %v164 = vld [vmem:[%s0] sm:$0x77]
  %v166 = vcombine.high %v164, %v164
  %v167 = vrot.slane %v164, 1
  %v168 = vrot.slane %v166, 1
  %169 = vrot.lane.b32.xlu0 %v167, 110
  %v170 = vpop.permute.xlu0 %169
  %171 = vrot.lane.b32.xlu0 %v168, 110
  %v172 = vpop.permute.xlu0 %171
  %vm173 = vcmask 900096
  %v174 = vsel %vm173, %v170, %v172
  %177 = vst [vmem:[#allocation2 + $0x20] sm:$0x80] %v174
  %vm178 = vcmask 900103
  %179 = vst.msk [vmem:[#allocation2 + $0x28] sm:$0x80] %vm178, %v172
  %180 = vst [vmem:[#allocation2 + $0x40] sm:$0x3] %v174
  %vm181 = vcmask 893952
  %182 = vst.msk [vmem:[#allocation2 + $0x48] sm:$0x3] %vm181, %v172
  %v183 = vld [vmem:[%s36] sm:$0x77]
  %v185 = vcombine.high %v183, %v183
  %v186 = vrot.slane %v183, 1
  %v187 = vrot.slane %v185, 1
  %188 = vrot.lane.b32.xlu0 %v186, 110
  %v189 = vpop.permute.xlu0 %188
  %190 = vrot.lane.b32.xlu0 %v187, 110
  %v191 = vpop.permute.xlu0 %190
  %v192 = vsel %vm173, %v189, %v191
  %195 = vst [vmem:[#allocation2 + $0x30] sm:$0x80] %v192
  %196 = vst.msk [vmem:[#allocation2 + $0x38] sm:$0x80] %vm178, %v191
  %197 = vst [vmem:[#allocation2 + $0x50] sm:$0x3] %v192
  %198 = vst.msk [vmem:[#allocation2 + $0x58] sm:$0x3] %vm181, %v191
  %v199 = vld [vmem:[%s0] sm:$0x77]
  %v201 = vcombine.high %v199, %v199
  %v202 = vrot.slane %v199, 6
  %v203 = vrot.slane %v201, 6
  %204 = vrot.lane.b32.xlu0 %v202, 96
  %v205 = vpop.permute.xlu0 %204
  %206 = vrot.lane.b32.xlu0 %v203, 96
  %v207 = vpop.permute.xlu0 %206
  %vm208 = vcmask 785408
  %v209 = vsel %vm208, %v205, %v207
  %212 = vst [vmem:[#allocation2 + $0x40] sm:$0x1c] %v209
  %vm213 = vcmask 782338
  %214 = vst.msk [vmem:[#allocation2 + $0x48] sm:$0x1c] %vm213, %v207
  %v215 = vld [vmem:[%s36] sm:$0x77]
  %v217 = vcombine.high %v215, %v215
  %v218 = vrot.slane %v215, 6
  %v219 = vrot.slane %v217, 6
  %220 = vrot.lane.b32.xlu0 %v218, 96
  %v221 = vpop.permute.xlu0 %220
  %222 = vrot.lane.b32.xlu0 %v219, 96
  %v223 = vpop.permute.xlu0 %222
  %v224 = vsel %vm208, %v221, %v223
  %227 = vst [vmem:[#allocation2 + $0x50] sm:$0x1c] %v224
  %228 = vst.msk [vmem:[#allocation2 + $0x58] sm:$0x1c] %vm213, %v223
  %v229 = vld [vmem:[%s0] sm:$0x77]
  %v231 = vcombine.high %v229, %v229
  %v232 = vrot.slane %v229, 3
  %v233 = vrot.slane %v231, 3
  %234 = vrot.lane.b32.xlu0 %v232, 95
  %v235 = vpop.permute.xlu0 %234
  %236 = vrot.lane.b32.xlu0 %v233, 95
  %v237 = vpop.permute.xlu0 %236
  %vm238 = vcmask 777216
  %v239 = vsel %vm238, %v235, %v237
  %242 = vst [vmem:[#allocation2 + $0x40] sm:$0xe0] %v239
  %vm243 = vcmask 777221
  %244 = vst.msk [vmem:[#allocation2 + $0x48] sm:$0xe0] %vm243, %v237
  %v245 = vld [vmem:[%s36] sm:$0x77]
  %v247 = vcombine.high %v245, %v245
  %v248 = vrot.slane %v245, 3
  %v249 = vrot.slane %v247, 3
  %250 = vrot.lane.b32.xlu0 %v248, 95
  %v251 = vpop.permute.xlu0 %250
  %252 = vrot.lane.b32.xlu0 %v249, 95
  %v253 = vpop.permute.xlu0 %252
  %v254 = vsel %vm238, %v251, %v253
  %257 = vst [vmem:[#allocation2 + $0x50] sm:$0xe0] %v254
  %258 = vst.msk [vmem:[#allocation2 + $0x58] sm:$0xe0] %vm243, %v253
  %v259 = vld [vmem:[%s0] sm:$0x77]
  %v261 = vcombine.high %v259, %v259
  %262 = vrot.lane.b32.xlu0 %v259, 94
  %v263 = vpop.permute.xlu0 %262
  %264 = vrot.lane.b32.xlu0 %v261, 94
  %v265 = vpop.permute.xlu0 %264
  %vm266 = vcmask 769024
  %v267 = vsel %vm266, %v263, %v265
  %270 = vst [vmem:[#allocation2 + $0x60] sm:$0x7] %v267
  %vm271 = vcmask 763904
  %272 = vst.msk [vmem:[#allocation2 + $0x68] sm:$0x7] %vm271, %v265
  %v273 = vld [vmem:[%s36] sm:$0x77]
  %v275 = vcombine.high %v273, %v273
  %276 = vrot.lane.b32.xlu0 %v273, 94
  %v277 = vpop.permute.xlu0 %276
  %278 = vrot.lane.b32.xlu0 %v275, 94
  %v279 = vpop.permute.xlu0 %278
  %v280 = vsel %vm266, %v277, %v279
  %283 = vst [vmem:[#allocation2 + $0x70] sm:$0x7] %v280
  %284 = vst.msk [vmem:[#allocation2 + $0x78] sm:$0x7] %vm271, %v279
  %v285 = vld [vmem:[%s1] sm:$0x1f]
  %v286 = vld [vmem:[#allocation2] sm:$0xff]
  %v287 = vld [vmem:[#allocation2 + $0x8] sm:$0xff]
  %v288 = vld [vmem:[#allocation2 + $0x10] sm:$0xff]
  %v289 = vld [vmem:[#allocation2 + $0x18] sm:$0xff]
  %v290 = vld [vmem:[#allocation2 + $0x20] sm:$0xff]
  %v291 = vld [vmem:[#allocation2 + $0x28] sm:$0xff]
  %v292 = vld [vmem:[#allocation2 + $0x30] sm:$0xff]
  %v293 = vld [vmem:[#allocation2 + $0x38] sm:$0xff]
  %v294 = vld [vmem:[#allocation2 + $0x40] sm:$0xff]
  %v295 = vld [vmem:[#allocation2 + $0x48] sm:$0xff]
  %v296 = vld [vmem:[#allocation2 + $0x50] sm:$0xff]
  %v297 = vld [vmem:[#allocation2 + $0x58] sm:$0xff]
  %v298 = vld [vmem:[#allocation2 + $0x60] sm:$0x7]
  %v299 = vld [vmem:[#allocation2 + $0x68] sm:$0x7]
  %v300 = vld [vmem:[#allocation2 + $0x70] sm:$0x7]
  %v301 = vld [vmem:[#allocation2 + $0x78] sm:$0x7]
  %v302 = vld [vmem:[%s2] sm:$0x1f]
  %304 = vset.pattern.permute.xlu0 0
  %305 = vperm.xlu0 %304, %v302
  %v306 = vpop.permute.xlu0 %305
  %vm308 = vcmask 220160
  %v310 = vsel %vm308, %v285, 0
  %vm312 = vcmask 1042432
  %v314 = vsel %vm312, %v298, 0
  %v317 = vsel %vm312, %v299, 0
  %v320 = vsel %vm312, %v300, 0
  %v323 = vsel %vm312, %v301, 0
  %325 = vmatprep.subr.mxu0 %v287
  %326 = vmatpush1.msra.mxu0 %v286
  %327 = vmatprep.subr.mxu0 %v291
  %328 = vmatpush1.msra.mxu0 %v290
  %329 = vmatprep.subr.mxu0 %v295
  %330 = vmatpush1.msra.mxu0 %v294
  %331 = vmatprep.subr.mxu0 %v317
  %332 = vmatpush1.msra.mxu0 %v314
  %333 = vmatprep.subr.mxu0 0.0
  %334 = vmatpush1.msra.mxu0 0.0
  %335 = vmatprep.subr.mxu0 0.0
  %336 = vmatpush1.msra.mxu0 0.0
  %337 = vmatprep.subr.mxu0 0.0
  %338 = vmatpush1.msra.mxu0 0.0
  %339 = vmatprep.subr.mxu0 0.0
  %340 = vmatpush1.msra.mxu0 0.0
  %341 = vmatprep.subr.mxu0 0.0
  %342 = vmatpush1.msra.mxu0 0.0
  %343 = vmatprep.subr.mxu0 0.0
  %344 = vmatpush1.msra.mxu0 0.0
  %345 = vmatprep.subr.mxu0 0.0
  %346 = vmatpush1.msra.mxu0 0.0
  %347 = vmatprep.subr.mxu0 0.0
  %348 = vmatpush1.msra.mxu0 0.0
  %349 = vmatprep.subr.mxu0 0.0
  %350 = vmatpush1.msra.mxu0 0.0
  %351 = vmatprep.subr.mxu0 0.0
  %352 = vmatpush1.msra.mxu0 0.0
  %353 = vmatprep.subr.mxu0 0.0
  %354 = vmatpush1.msra.mxu0 0.0
  %355 = vmatprep.subr.mxu0 0.0
  %356 = vmatpush1.msra.mxu0 0.0
  %357 = vmatprep.subr.mxu0 0.0
  %358 = vmatpush1.msra.mxu0 0.0
  %359 = vmatprep.subr.mxu0 0.0
  %360 = vmatpush1.msra.mxu0 0.0
  %361 = vmatprep.subr.mxu0 0.0
  %362 = vmatpush1.msra.mxu0 0.0
  %363 = vmatprep.subr.mxu0 0.0
  %364 = vmatpush1.msra.mxu0 0.0
  %365 = vmatprep.subr.mxu0 0.0
  %366 = vmatpush1.msra.mxu0 0.0
  %367 = vmatprep.subr.mxu0 0.0
  %368 = vmatpush1.msra.mxu0 0.0
  %369 = vmatprep.subr.mxu0 0.0
  %370 = vmatpush1.msra.mxu0 0.0
  %371 = vmatprep.subr.mxu0 0.0
  %372 = vmatpush1.msra.mxu0 0.0
  %373 = vmatprep.subr.mxu0 0.0
  %374 = vmatpush1.msra.mxu0 0.0
  %375 = vmatprep.subr.mxu0 0.0
  %376 = vmatpush1.msra.mxu0 0.0
  %377 = vmatprep.subr.mxu0 0.0
  %378 = vmatpush1.msra.mxu0 0.0
  %379 = vmatprep.subr.mxu0 0.0
  %380 = vmatpush1.msra.mxu0 0.0
  %381 = vmatprep.subr.mxu0 0.0
  %382 = vmatpush1.msra.mxu0 0.0
  %383 = vmatprep.subr.mxu0 0.0
  %384 = vmatpush1.msra.mxu0 0.0
  %385 = vmatprep.subr.mxu0 0.0
  %386 = vmatpush1.msra.mxu0 0.0
  %387 = vmatprep.subr.mxu0 0.0
  %388 = vmatpush1.msra.mxu0 0.0
  %389 = vmatprep.mubr.f32.mxu0 0.0
  %390 = vmatmul.mubr.f32.gmra.mrb[0].mxu0 %v310
  %v391 = vpop.f32.mrb[0].mxu0
  %v392 = vadd.f32 %v306, %v391
  %v393 = vpop.f32.mrb[0].mxu0
  %v394 = vadd.f32 %v306, %v393
  %395 = vdwg.mxu0
  %396 = vmatprep.subr.mxu0 %v289
  %397 = vmatpush1.msra.mxu0 %v288
  %398 = vmatprep.subr.mxu0 %v293
  %399 = vmatpush1.msra.mxu0 %v292
  %400 = vmatprep.subr.mxu0 %v297
  %401 = vmatpush1.msra.mxu0 %v296
  %402 = vmatprep.subr.mxu0 %v323
  %403 = vmatpush1.msra.mxu0 %v320
  %404 = vmatprep.subr.mxu0 0.0
  %405 = vmatpush1.msra.mxu0 0.0
  %406 = vmatprep.subr.mxu0 0.0
  %407 = vmatpush1.msra.mxu0 0.0
  %408 = vmatprep.subr.mxu0 0.0
  %409 = vmatpush1.msra.mxu0 0.0
  %410 = vmatprep.subr.mxu0 0.0
  %411 = vmatpush1.msra.mxu0 0.0
  %412 = vmatprep.subr.mxu0 0.0
  %413 = vmatpush1.msra.mxu0 0.0
  %414 = vmatprep.subr.mxu0 0.0
  %415 = vmatpush1.msra.mxu0 0.0
  %416 = vmatprep.subr.mxu0 0.0
  %417 = vmatpush1.msra.mxu0 0.0
  %418 = vmatprep.subr.mxu0 0.0
  %419 = vmatpush1.msra.mxu0 0.0
  %420 = vmatprep.subr.mxu0 0.0
  %421 = vmatpush1.msra.mxu0 0.0
  %422 = vmatprep.subr.mxu0 0.0
  %423 = vmatpush1.msra.mxu0 0.0
  %424 = vmatprep.subr.mxu0 0.0
  %425 = vmatpush1.msra.mxu0 0.0
  %426 = vmatprep.subr.mxu0 0.0
  %427 = vmatpush1.msra.mxu0 0.0
  %428 = vmatprep.subr.mxu0 0.0
  %429 = vmatpush1.msra.mxu0 0.0
  %430 = vmatprep.subr.mxu0 0.0
  %431 = vmatpush1.msra.mxu0 0.0
  %432 = vmatprep.subr.mxu0 0.0
  %433 = vmatpush1.msra.mxu0 0.0
  %434 = vmatprep.subr.mxu0 0.0
  %435 = vmatpush1.msra.mxu0 0.0
  %436 = vmatprep.subr.mxu0 0.0
  %437 = vmatpush1.msra.mxu0 0.0
  %438 = vmatprep.subr.mxu0 0.0
  %439 = vmatpush1.msra.mxu0 0.0
  %440 = vmatprep.subr.mxu0 0.0
  %441 = vmatpush1.msra.mxu0 0.0
  %442 = vmatprep.subr.mxu0 0.0
  %443 = vmatpush1.msra.mxu0 0.0
  %444 = vmatprep.subr.mxu0 0.0
  %445 = vmatpush1.msra.mxu0 0.0
  %446 = vmatprep.subr.mxu0 0.0
  %447 = vmatpush1.msra.mxu0 0.0
  %448 = vmatprep.subr.mxu0 0.0
  %449 = vmatpush1.msra.mxu0 0.0
  %450 = vmatprep.subr.mxu0 0.0
  %451 = vmatpush1.msra.mxu0 0.0
  %452 = vmatprep.subr.mxu0 0.0
  %453 = vmatpush1.msra.mxu0 0.0
  %454 = vmatprep.subr.mxu0 0.0
  %455 = vmatpush1.msra.mxu0 0.0
  %456 = vmatprep.subr.mxu0 0.0
  %457 = vmatpush1.msra.mxu0 0.0
  %458 = vmatprep.subr.mxu0 0.0
  %459 = vmatpush1.msra.mxu0 0.0
  %460 = vmatprep.mubr.f32.mxu0 0.0
  %461 = vmatmul.mubr.f32.gmra.mrb[0].mxu0 %v310
  %v462 = vpop.f32.mrb[0].mxu0
  %v463 = vadd.f32 %v306, %v462
  %v464 = vpop.f32.mrb[0].mxu0
  %v465 = vadd.f32 %v306, %v464
  %466 = vdwg.mxu0
  %467 = vst [vmem:[%s3] sm:$0x1f] %v392
  %468 = vst [vmem:[%s3 + $0x8] sm:$0x1f] %v394
  %s469 = scalar_lea.vmem %s3, 16
  %470 = vst [vmem:[%s469] sm:$0x1f] %v463
  %471 = vst [vmem:[%s469 + $0x8] sm:$0x1f] %v465
  // Predicated region
  $region14: #{tpu_custom_call.1} parent=0 // pred_check
    _
  $region15: #{tpu_custom_call.1} parent=0 // pred_check_branch
    %473 = sbr.rel (0) target = $region17
  $region16: #{tpu_custom_call.1} parent=0 // pred_region
    _
  $region17: #{tpu_custom_call.1} parent=0 // pred_fallthru
    _
  // Predicated region
  $region18: #{tpu_custom_call.1} parent=0 // pred_check
    _
  $region19: #{tpu_custom_call.1} parent=0 // pred_check_branch
    %475 = sbr.rel (0) target = $region21
  $region20: #{tpu_custom_call.1} parent=0 // pred_region
    _
  $region21: #{tpu_custom_call.1} parent=0 // pred_fallthru
    _

</llo_original>
